<compile_context>
chip_gen: v5e
topology: v5e:2x2
jax: 0.10.0
libtpu: 0.0.40
codegen_flags: <defaults>
</compile_context>

<pallas_src>
import jax
import jax.numpy as jnp
from jax.experimental import pallas as pl
from jax.experimental.pallas import tpu as pltpu


_LANE = 128
_SUBLANE = 8
# Double-buffered (in + out) VMEM budget for tile sizing.  Conservative so the
# same tiles fit v7x's 32 MiB scoped-VMEM default as well as v5e/v6e.
_VMEM_BUDGET = 16 * 1024 * 1024
_VMEM_LIMIT = 32 * 1024 * 1024
# Below this many elements a kernel launch is pure dispatch overhead.
_MIN_KERNEL_ELEMS = 1024


def _copy_kernel(*refs):
    """Identity copy of the current tile(s): first half inputs, second half outputs."""
    n = len(refs) // 2
    for i in range(n):
        refs[n + i][...] = refs[i][...]


def _lane_dense_2d(x: jax.Array) -> jax.Array:
    """Free (contiguous) reshape to a 2-D view whose last dim is lane-dense
    (a multiple of 128) whenever possible, so stores are unmasked vst."""
    if x.ndim >= 2 and x.shape[-1] % _LANE == 0:
        return x.reshape(-1, x.shape[-1])
    size = x.size
    for lanes in (1024, 512, 256, _LANE):
        if size % lanes == 0:
            return x.reshape(-1, lanes)
    # Fallback: keep the natural last dim (block == full extent is legal).
    # Partial-lane stores are unavoidable here without padding.
    if x.ndim == 0:
        return x.reshape(1, 1)
    if x.ndim == 1:
        return x.reshape(1, -1)
    return x.reshape(-1, x.shape[-1])


def _choose_tile_rows(rows: int, cols: int, itemsizes) -> int:
    """Largest row tile (multiple of 8, <= 1024) whose double-buffered
    (in + out) footprint for all fused arrays fits the VMEM budget."""
    bytes_per_row = sum(cols * isz for isz in itemsizes)
    max_rows = max(_SUBLANE, _VMEM_BUDGET // max(4 * bytes_per_row, 1))
    tile = min(rows, 1024, max_rows)
    if tile < rows:
        tile = max(_SUBLANE, (tile // _SUBLANE) * _SUBLANE)
    return tile


def _pallas_identity_fused(arrays):
    """Bit-exact identity copy of one or more same-shaped 2-D arrays in a
    single pallas_call with aliased input/output buffers."""
    rows, cols = arrays[0].shape
    itemsizes = [a.dtype.itemsize for a in arrays]
    tile = _choose_tile_rows(rows, cols, itemsizes)
    grid = (pl.cdiv(rows, tile),)
    spec = pl.BlockSpec((tile, cols), lambda i: (i, 0))
    total_bytes = sum(a.size * a.dtype.itemsize for a in arrays)

    out = pl.pallas_call(
        _copy_kernel,
        out_shape=tuple(jax.ShapeDtypeStruct(a.shape, a.dtype) for a in arrays),
        grid_spec=pltpu.PrefetchScalarGridSpec(
            num_scalar_prefetch=0,
            grid=grid,
            in_specs=[spec] * len(arrays),
            out_specs=tuple([spec] * len(arrays)),
        ),
        input_output_aliases={i: i for i in range(len(arrays))},
        cost_estimate=pl.CostEstimate(
            flops=0, transcendentals=0, bytes_accessed=2 * total_bytes
        ),
        compiler_params=pltpu.CompilerParams(
            dimension_semantics=("parallel",),  # shards row grid across v7x's 2 TCs
            vmem_limit_bytes=_VMEM_LIMIT,
        ),
    )(*arrays)
    return out


def pallas_identity(*arrays):
    """Identity pass-through.  Arrays large enough to be worth a launch go
    through one fused, aliased Pallas copy; tiny / empty arrays and None are
    returned unchanged (which is exactly the module's semantics)."""
    results = [None] * len(arrays)
    plan = []  # (original index, lane-dense 2-D view, original shape)
    for idx, x in enumerate(arrays):
        if x is None:
            continue
        x = jnp.asarray(x)
        if x.size == 0 or x.size < _MIN_KERNEL_ELEMS:
            results[idx] = x  # no kernel: launch overhead would be 100% of runtime
            continue
        plan.append((idx, _lane_dense_2d(x), x.shape))

    # Fuse arrays whose canonical 2-D views share a shape into one launch.
    groups = {}
    for item in plan:
        groups.setdefault(item[1].shape, []).append(item)
    for items in groups.values():
        outs = _pallas_identity_fused([x2d for _, x2d, _ in items])
        for (idx, _, shape), o in zip(items, outs):
            results[idx] = o.reshape(shape)
    return tuple(results)


class EmptyTransform:
    """JAX/Pallas port of _EmptyTransform (no parameters, no compute).

    forward() is a true pass-through (zero HBM traffic), matching the PyTorch
    module.  forward_materialized() routes through the fused, aliased Pallas
    identity kernel for cases where a materialized op is needed in a pipeline.
    """

    def forward(self, Y, Yvar=None):
        return (Y, Yvar)

    __call__ = forward

    def forward_materialized(self, Y, Yvar=None):
        Y_out, Yvar_out = pallas_identity(Y, Yvar)
        return (Y_out, Yvar_out)

    def untransform(self, Y, Yvar=None):
        return (Y, Yvar)

    def untransform_posterior(self, posterior):
        # Identity on the posterior object; no tensor compute involved.
        return posterior


if __name__ == "__main__":
    key = jax.random.PRNGKey(0)
    k1, k2 = jax.random.split(key)

    # Small outcome-transform-like shapes: (n_points, n_outputs).
    # 256 x 32 exercises the kernel path and reshapes lane-dense to (8, 1024).
    Y = jax.random.normal(k1, (256, 32), dtype=jnp.float32)
    Yvar = jax.nn.softplus(jax.random.normal(k2, (256, 32), dtype=jnp.float32))

    Y_host = jax.device_get(Y)
    Yvar_host = jax.device_get(Yvar)

    mod = EmptyTransform()

    # Original module semantics: pure pass-through, nothing launched.
    Y_f, Yvar_f = mod.forward(Y, Yvar)
    assert Y_f is Y and Yvar_f is Yvar

    # Exercise the fused Pallas kernel once.
    Y_out, Yvar_out = mod.forward_materialized(Y, Yvar)
    jax.block_until_ready((Y_out, Yvar_out))

    # Yvar=None path (single-array launch).
    Y_only, none_out = mod.forward_materialized(Y, None)
    jax.block_until_ready(Y_only)

    assert Y_out.shape == Y_host.shape and Y_out.dtype == Y.dtype
    assert Yvar_out.shape == Yvar_host.shape and Yvar_out.dtype == Yvar.dtype
    assert none_out is None
    assert bool(jnp.array_equal(jax.device_get(Y_out), Y_host))
    assert bool(jnp.array_equal(jax.device_get(Yvar_out), Yvar_host))
    assert bool(jnp.array_equal(jax.device_get(Y_only), Y_host))

    # Tiny-array fast path (no kernel launch) still preserves semantics.
    y_small = jnp.arange(12, dtype=jnp.float32).reshape(3, 4)
    (y_small_out,) = pallas_identity(y_small)
    assert bool(jnp.array_equal(y_small_out, y_small))

    print("KERNEL_OK")
</pallas_src>

<mosaic_0001>
module attributes {stable_mosaic.version = 11 : i64} {
  func.func @_copy_kernel(%arg0: i32, %arg1: memref<8x1024xf32, #tpu.memory_space<vmem>>, %arg2: memref<8x1024xf32, #tpu.memory_space<vmem>>, %arg3: memref<8x1024xf32, #tpu.memory_space<vmem>>, %arg4: memref<8x1024xf32, #tpu.memory_space<vmem>>) attributes {dimension_semantics = [#tpu.dimension_semantics<parallel>], iteration_bounds = array<i64: 1>, scalar_prefetch = 0 : i64, scratch_operands = 0 : i64, tpu.core_type = #tpu.core_type<tc>, window_params = [{transform_indices = @transform_0, window_bounds = array<i64: 8, 1024>}, {transform_indices = @transform_1, window_bounds = array<i64: 8, 1024>}, {transform_indices = @transform_2, window_bounds = array<i64: 8, 1024>}, {transform_indices = @transform_3, window_bounds = array<i64: 8, 1024>}]} {
    %c0 = arith.constant 0 : index
    %c0_0 = arith.constant 0 : index
    %0 = vector.load %arg1[%c0, %c0_0] : memref<8x1024xf32, #tpu.memory_space<vmem>>, vector<8x1024xf32>
    %c0_1 = arith.constant 0 : index
    %c0_2 = arith.constant 0 : index
    %1 = vector.load %arg3[%c0_1, %c0_2] : memref<8x1024xf32, #tpu.memory_space<vmem>>, vector<8x1024xf32>
    tpu.vector_store %arg3[%c0_1, %c0_2], %0 {strides = array<i32>} : memref<8x1024xf32, #tpu.memory_space<vmem>>, vector<8x1024xf32>,
    %c0_3 = arith.constant 0 : index
    %c0_4 = arith.constant 0 : index
    %2 = vector.load %arg2[%c0_3, %c0_4] : memref<8x1024xf32, #tpu.memory_space<vmem>>, vector<8x1024xf32>
    %c0_5 = arith.constant 0 : index
    %c0_6 = arith.constant 0 : index
    %3 = vector.load %arg4[%c0_5, %c0_6] : memref<8x1024xf32, #tpu.memory_space<vmem>>, vector<8x1024xf32>
    tpu.vector_store %arg4[%c0_5, %c0_6], %2 {strides = array<i32>} : memref<8x1024xf32, #tpu.memory_space<vmem>>, vector<8x1024xf32>,
    return
  }
  func.func @transform_0(%arg0: i32) -> (i32, i32) {
    %c0_i32 = arith.constant 0 : i32
    %c0_i32_0 = arith.constant 0 : i32
    return %arg0, %c0_i32 : i32, i32
  }
  func.func @transform_1(%arg0: i32) -> (i32, i32) {
    %c0_i32 = arith.constant 0 : i32
    %c0_i32_0 = arith.constant 0 : i32
    return %arg0, %c0_i32 : i32, i32
  }
  func.func @transform_2(%arg0: i32) -> (i32, i32) {
    %c0_i32 = arith.constant 0 : i32
    %c0_i32_0 = arith.constant 0 : i32
    return %arg0, %c0_i32 : i32, i32
  }
  func.func @transform_3(%arg0: i32) -> (i32, i32) {
    %c0_i32 = arith.constant 0 : i32
    %c0_i32_0 = arith.constant 0 : i32
    return %arg0, %c0_i32 : i32, i32
  }
}

</mosaic_0001>

<llo_original>
// kernel: tpu_custom_call.1
$region0: #{tpu_custom_call.1}
  #allocation0 [shape = 'u32[]', space=smem, size = 0x4, offset = 0x4, fixed_abs, tag = 'smem constant byte address 0x4 - core index']
  #allocation1 [shape = 'u32[72,128]{1,0:T(1,128)}', space=vmem, size = 0x9000, scoped, tag = 'internal scratch']
  %s0 = inlined_call_operand.hbm [shape: f32[8,1024], index: 0, kind: input, shape index: {}, may-alias: {0,2}]
  %s1 = inlined_call_operand.hbm [shape: f32[8,1024], index: 1, kind: input, shape index: {}, may-alias: {1,3}]
  %s2 = inlined_call_operand.hbm [shape: f32[8,1024], index: 2, kind: output, shape index: {0}, may-alias: {0,2}]
  %s3 = inlined_call_operand.hbm [shape: f32[8,1024], index: 3, kind: output, shape index: {1}, may-alias: {1,3}]
  %4 = xla_tuple %s2, %s3
  %s5 = sld [smem:[#allocation0]]
  $region34: #{tpu_custom_call.1} parent=0
    _
  %s7 = ssub.s32 1, %s5
  %s8 = scalar_select 0, %s7, %s5
  $region1: #{tpu_custom_call.1} parent=0
    #allocation2 [shape = 'u8[32768]{0}', space=vmem, size = 0x8000, scoped, tag = 'input window, operand 0, single buffered']
    #allocation3 [shape = 's32[1]{0}', space=sflag, size = 0x4, scoped, tag = 'scoped memory for tpu_custom_call.1']
    #allocation4 [shape = 's32[1]{0}', space=sflag, size = 0x4, scoped, tag = 'scoped memory for tpu_custom_call.1']
    #allocation5 [shape = 'u8[32768]{0}', space=vmem, size = 0x8000, scoped, tag = 'input window, operand 1, single buffered']
    #allocation6 [shape = 's32[1]{0}', space=sflag, size = 0x4, scoped, tag = 'scoped memory for tpu_custom_call.1']
    #allocation7 [shape = 'u8[32768]{0}', space=vmem, size = 0x8000, scoped, tag = 'output window, operand 0, single buffered']
    #allocation8 [shape = 'u8[32768]{0}', space=vmem, size = 0x8000, scoped, tag = 'output window, operand 1, single buffered']
    #allocation9 [shape = 's32[1]{0}', space=sflag, size = 0x4, scoped, tag = 'scoped memory for tpu_custom_call.1']
    %9 = vsyncpa [#allocation3], 0
    %10 = vsyncpa [#allocation6], 0
    %11 = vsyncpa [#allocation4], 0
    %12 = vsyncpa [#allocation9], 0
    // Predicated region
    $region2: #{tpu_custom_call.1} parent=1 // pred_check
      _
    $region3: #{tpu_custom_call.1} parent=1 // pred_check_branch
      %14 = sbr.rel (0) target = $region5
    $region4: #{tpu_custom_call.1} parent=1 // pred_region
      %16 = vsyncadd [#allocation3], 0
      %s18 = sshll.u32 %s0, 4
      %s19 = int_to_ptr.hbm [resolvable:$true] %s18
      %s20 = sshll.u32 [#allocation2], 4
      %s21 = int_to_ptr.vmem [resolvable:$true] %s20
      %23 = dma.hbm_to_vmem [thread:$0]  %s19, 1024, %s21, [#allocation3]
    $region5: #{tpu_custom_call.1} parent=1 // pred_fallthru
      _
    // Predicated region
    $region6: #{tpu_custom_call.1} parent=1 // pred_check
      _
    $region7: #{tpu_custom_call.1} parent=1 // pred_check_branch
      %25 = sbr.rel (0) target = $region9
    $region8: #{tpu_custom_call.1} parent=1 // pred_region
      %27 = vsyncadd [#allocation6], 0
      %s29 = sshll.u32 %s1, 4
      %s30 = int_to_ptr.hbm [resolvable:$true] %s29
      %s31 = sshll.u32 [#allocation5], 4
      %s32 = int_to_ptr.vmem [resolvable:$true] %s31
      %34 = dma.hbm_to_vmem [thread:$0]  %s30, 1024, %s32, [#allocation6]
    $region9: #{tpu_custom_call.1} parent=1 // pred_fallthru
      _
    // Predicated region
    $region10: #{tpu_custom_call.1} parent=1 // pred_check
      _
    $region11: #{tpu_custom_call.1} parent=1 // pred_check_branch
      %36 = sbr.rel (0) target = $region13
    $region12: #{tpu_custom_call.1} parent=1 // pred_region
      %38 = dma.done [#allocation3], 1024
    $region13: #{tpu_custom_call.1} parent=1 // pred_fallthru
      _
    // Predicated region
    $region14: #{tpu_custom_call.1} parent=1 // pred_check
      _
    $region15: #{tpu_custom_call.1} parent=1 // pred_check_branch
      %40 = sbr.rel (0) target = $region17
    $region16: #{tpu_custom_call.1} parent=1 // pred_region
      %42 = dma.done [#allocation6], 1024
    $region17: #{tpu_custom_call.1} parent=1 // pred_fallthru
      _
    %v43 = vld [vmem:[#allocation2] sm:$0xff]
    %v44 = vld [vmem:[#allocation2 + $0x8] sm:$0xff]
    %v45 = vld [vmem:[#allocation2 + $0x10] sm:$0xff]
    %v46 = vld [vmem:[#allocation2 + $0x18] sm:$0xff]
    %v47 = vld [vmem:[#allocation2 + $0x20] sm:$0xff]
    %v48 = vld [vmem:[#allocation2 + $0x28] sm:$0xff]
    %v49 = vld [vmem:[#allocation2 + $0x30] sm:$0xff]
    %v50 = vld [vmem:[#allocation2 + $0x38] sm:$0xff]
    %51 = vst [vmem:[#allocation7] sm:$0xff] %v43
    %52 = vst [vmem:[#allocation7 + $0x8] sm:$0xff] %v44
    %53 = vst [vmem:[#allocation7 + $0x10] sm:$0xff] %v45
    %54 = vst [vmem:[#allocation7 + $0x18] sm:$0xff] %v46
    %55 = vst [vmem:[#allocation7 + $0x20] sm:$0xff] %v47
    %56 = vst [vmem:[#allocation7 + $0x28] sm:$0xff] %v48
    %57 = vst [vmem:[#allocation7 + $0x30] sm:$0xff] %v49
    %58 = vst [vmem:[#allocation7 + $0x38] sm:$0xff] %v50
    %v59 = vld [vmem:[#allocation5] sm:$0xff]
    %v60 = vld [vmem:[#allocation5 + $0x8] sm:$0xff]
    %v61 = vld [vmem:[#allocation5 + $0x10] sm:$0xff]
    %v62 = vld [vmem:[#allocation5 + $0x18] sm:$0xff]
    %v63 = vld [vmem:[#allocation5 + $0x20] sm:$0xff]
    %v64 = vld [vmem:[#allocation5 + $0x28] sm:$0xff]
    %v65 = vld [vmem:[#allocation5 + $0x30] sm:$0xff]
    %v66 = vld [vmem:[#allocation5 + $0x38] sm:$0xff]
    %67 = vst [vmem:[#allocation8] sm:$0xff] %v59
    %68 = vst [vmem:[#allocation8 + $0x8] sm:$0xff] %v60
    %69 = vst [vmem:[#allocation8 + $0x10] sm:$0xff] %v61
    %70 = vst [vmem:[#allocation8 + $0x18] sm:$0xff] %v62
    %71 = vst [vmem:[#allocation8 + $0x20] sm:$0xff] %v63
    %72 = vst [vmem:[#allocation8 + $0x28] sm:$0xff] %v64
    %73 = vst [vmem:[#allocation8 + $0x30] sm:$0xff] %v65
    %74 = vst [vmem:[#allocation8 + $0x38] sm:$0xff] %v66
    // Predicated region
    $region18: #{tpu_custom_call.1} parent=1 // pred_check
      _
    $region19: #{tpu_custom_call.1} parent=1 // pred_check_branch
      %76 = sbr.rel (0) target = $region21
    $region20: #{tpu_custom_call.1} parent=1 // pred_region
      %78 = vsyncadd [#allocation4], 0
      %s80 = sshll.u32 [#allocation7], 4
      %s81 = int_to_ptr.vmem [resolvable:$true] %s80
      %s82 = sshll.u32 %s2, 4
      %s83 = int_to_ptr.hbm [resolvable:$true] %s82
      %85 = dma.vmem_to_hbm [thread:$0]  %s81, 1024, %s83, [#allocation4]
    $region21: #{tpu_custom_call.1} parent=1 // pred_fallthru
      _
    // Predicated region
    $region22: #{tpu_custom_call.1} parent=1 // pred_check
      _
    $region23: #{tpu_custom_call.1} parent=1 // pred_check_branch
      %87 = sbr.rel (0) target = $region25
    $region24: #{tpu_custom_call.1} parent=1 // pred_region
      %89 = vsyncadd [#allocation9], 0
      %s91 = sshll.u32 [#allocation8], 4
      %s92 = int_to_ptr.vmem [resolvable:$true] %s91
      %s93 = sshll.u32 %s3, 4
      %s94 = int_to_ptr.hbm [resolvable:$true] %s93
      %96 = dma.vmem_to_hbm [thread:$0]  %s92, 1024, %s94, [#allocation9]
    $region25: #{tpu_custom_call.1} parent=1 // pred_fallthru
      _
    // Predicated region
    $region26: #{tpu_custom_call.1} parent=1 // pred_check
      _
    $region27: #{tpu_custom_call.1} parent=1 // pred_check_branch
      %98 = sbr.rel (0) target = $region29
    $region28: #{tpu_custom_call.1} parent=1 // pred_region
      %100 = dma.done [#allocation4], 1024
    $region29: #{tpu_custom_call.1} parent=1 // pred_fallthru
      _
    // Predicated region
    $region30: #{tpu_custom_call.1} parent=1 // pred_check
      _
    $region31: #{tpu_custom_call.1} parent=1 // pred_check_branch
      %102 = sbr.rel (0) target = $region33
    $region32: #{tpu_custom_call.1} parent=1 // pred_region
      %104 = dma.done [#allocation9], 1024
    $region33: #{tpu_custom_call.1} parent=1 // pred_fallthru
      _
    %105 = vsyncpa [#allocation3], 1
    %106 = vsyncpa [#allocation6], 1
    %107 = vsyncpa [#allocation4], 1
    %108 = vsyncpa [#allocation9], 1

</llo_original>
